<compile_context>
chip_gen: v5e
topology: v5e:2x2
jax: 0.10.0
libtpu: 0.0.40
codegen_flags: <defaults>
</compile_context>

<pallas_src>
import functools

import jax
import jax.numpy as jnp
from jax.experimental import pallas as pl
from jax.experimental.pallas import tpu as pltpu

D_IN, D_H1, D_H2, D_OUT = 512, 256, 128, 8
BN_EPS = 1e-3              # matches nn.SyncBatchNorm(..., eps=0.001)
MAX_TILE = 2048            # rows per grid step; ~23 MiB VMEM worst case (w/ wlh)
SINGLE_BLOCK_MAX = 1024    # below this, run the whole batch as one block


def _cdiv(a, b):
    return -(-a // b)


def _round_up(x, m):
    return ((x + m - 1) // m) * m


def _pick_tile(n):
    """Rows per grid step.

    n <= 1024: one block (row dim == full array dim is always layout-legal,
    even for ragged n).  Larger n: aim for >=4 grid steps so both v7x
    TensorCores get work and the DMA pipeline has depth, rounded to a multiple
    of 128 rows and capped at MAX_TILE for VMEM.
    """
    if n <= SINGLE_BLOCK_MAX:
        return n
    return min(MAX_TILE, _round_up(_cdiv(n, 4), 128))


# ---------------------------------------------------------------------------
# Kernels (wlh / no-wlh variants)
# ---------------------------------------------------------------------------
def _head_kernel_wlh(x_ref, wlh_ref,
                     w1_ref, b1_ref, w2_ref, b2_ref, w3_ref, b3_ref,
                     out_ref):
    # feats = feats + wlh, then bf16 for the MXU (no-op if inputs already bf16).
    x = (x_ref[...] + wlh_ref[...]).astype(jnp.bfloat16)

    # Linear(512,256,bias=False) with BN1 scale folded in -> +shift -> ReLU
    h1 = jnp.dot(x, w1_ref[...], preferred_element_type=jnp.float32)
    h1 = jnp.maximum(h1 + b1_ref[...], 0.0).astype(jnp.bfloat16)

    # Linear(256,128,bias=False) with BN2 scale folded in -> +shift -> ReLU
    h2 = jnp.dot(h1, w2_ref[...], preferred_element_type=jnp.float32)
    h2 = jnp.maximum(h2 + b2_ref[...], 0.0)

    # Linear(128,8) with bias, kept in f32 (tiny; improves sigma precision).
    out = jnp.dot(h2, w3_ref[...], preferred_element_type=jnp.float32) + b3_ref[...]
    out_ref[...] = out.astype(out_ref.dtype)


def _head_kernel_nowlh(x_ref,
                       w1_ref, b1_ref, w2_ref, b2_ref, w3_ref, b3_ref,
                       out_ref):
    x = x_ref[...].astype(jnp.bfloat16)

    h1 = jnp.dot(x, w1_ref[...], preferred_element_type=jnp.float32)
    h1 = jnp.maximum(h1 + b1_ref[...], 0.0).astype(jnp.bfloat16)

    h2 = jnp.dot(h1, w2_ref[...], preferred_element_type=jnp.float32)
    h2 = jnp.maximum(h2 + b2_ref[...], 0.0)

    out = jnp.dot(h2, w3_ref[...], preferred_element_type=jnp.float32) + b3_ref[...]
    out_ref[...] = out.astype(out_ref.dtype)


# ---------------------------------------------------------------------------
# pallas_call builder
# ---------------------------------------------------------------------------
@functools.lru_cache(maxsize=None)
def _build_call(n, tile, with_wlh, in_itemsize):
    # NOTE: keyed on the concrete batch size.  In serving paths with highly
    # variable N, bucket N upstream -- both this cache and XLA recompile per
    # distinct shape.
    grid = (_cdiv(n, tile),)

    feat_spec = pl.BlockSpec((tile, D_IN), lambda i: (i, 0))
    # Weights / BN shifts never change block index -> DMA'd once, VMEM-resident
    # across all grid steps (the repeated (0,0) index elides the per-step DMA).
    resident = lambda shape: pl.BlockSpec(shape, lambda i: (0, 0))

    in_specs = [feat_spec]
    if with_wlh:
        in_specs.append(feat_spec)
    in_specs += [
        resident((D_IN, D_H1)),   # W1 (BN1 scale folded, bf16)
        resident((1, D_H1)),      # BN1 shift (f32)
        resident((D_H1, D_H2)),   # W2 (BN2 scale folded, bf16)
        resident((1, D_H2)),      # BN2 shift (f32)
        resident((D_H2, D_OUT)),  # W3 (f32)
        resident((1, D_OUT)),     # b3 (f32)
    ]

    n_stream = 2 if with_wlh else 1
    weight_bytes = (D_IN * D_H1 + D_H1 * D_H2) * 2 \
                   + (D_H2 * D_OUT + D_H1 + D_H2 + D_OUT) * 4
    cost = pl.CostEstimate(
        flops=2 * n * (D_IN * D_H1 + D_H1 * D_H2 + D_H2 * D_OUT),
        transcendentals=0,
        bytes_accessed=n_stream * n * D_IN * in_itemsize
                       + weight_bytes + n * D_OUT * 4,
    )

    kernel = _head_kernel_wlh if with_wlh else _head_kernel_nowlh
    return pl.pallas_call(
        kernel,
        out_shape=jax.ShapeDtypeStruct((n, D_OUT), jnp.float32),
        grid=grid,
        in_specs=in_specs,
        out_specs=pl.BlockSpec((tile, D_OUT), lambda i: (i, 0)),
        compiler_params=pltpu.CompilerParams(
            dimension_semantics=("parallel",),
            # tile=2048 + wlh needs ~23 MiB (streams + intermediates); raise the
            # scoped limit so it also fits v5e's 16 MiB default.  32 MiB is well
            # under every chip's physical VMEM.
            vmem_limit_bytes=32 << 20,
        ),
        cost_estimate=cost,
    )


def simple_head_forward(feats, params, wlh=None):
    """feats: [N, 512] (f32 or bf16). Returns dict with 'coors' [N,4], 'sigma' [N,4]."""
    n = feats.shape[0]
    tile = _pick_tile(n)
    call = _build_call(n, tile, wlh is not None, jnp.dtype(feats.dtype).itemsize)
    args = (feats,) if wlh is None else (feats, wlh)
    args += (params["w1"], params["b1"],
             params["w2"], params["b2"],
             params["w3"], params["b3"])
    res = call(*args)
    return {"coors": res[:, :4], "sigma": res[:, 4:]}


# ---------------------------------------------------------------------------
# Parameter construction / preparation
# ---------------------------------------------------------------------------
def init_raw_params(key):
    """Raw module-style params: Linear weights stored [in, out], BN stats unfolded."""
    ks = jax.random.split(key, 12)
    raw = {
        "w1": jax.random.normal(ks[0], (D_IN, D_H1), jnp.float32) * 0.02,
        "w2": jax.random.normal(ks[1], (D_H1, D_H2), jnp.float32) * 0.02,
        "w3": jax.random.normal(ks[2], (D_H2, D_OUT), jnp.float32) * 0.02,
        "b3": jax.random.normal(ks[3], (D_OUT,), jnp.float32) * 0.02,
        "g1": 1.0 + 0.1 * jax.random.normal(ks[4], (D_H1,), jnp.float32),
        "be1": 0.1 * jax.random.normal(ks[5], (D_H1,), jnp.float32),
        "m1": 0.1 * jax.random.normal(ks[6], (D_H1,), jnp.float32),
        "v1": jnp.abs(1.0 + 0.1 * jax.random.normal(ks[7], (D_H1,), jnp.float32)),
        "g2": 1.0 + 0.1 * jax.random.normal(ks[8], (D_H2,), jnp.float32),
        "be2": 0.1 * jax.random.normal(ks[9], (D_H2,), jnp.float32),
        "m2": 0.05 * jax.random.normal(ks[10], (D_H2,), jnp.float32),
        "v2": jnp.abs(1.0 + 0.1 * jax.random.normal(ks[11], (D_H2,), jnp.float32)),
    }
    return raw


def prepare_params(raw):
    """Fold BN (inference form) into the Linear weights; cast big matmul weights to bf16."""
    s1 = raw["g1"] / jnp.sqrt(raw["v1"] + BN_EPS)
    sh1 = raw["be1"] - raw["m1"] * s1
    s2 = raw["g2"] / jnp.sqrt(raw["v2"] + BN_EPS)
    sh2 = raw["be2"] - raw["m2"] * s2
    return {
        "w1": (raw["w1"] * s1[None, :]).astype(jnp.bfloat16),
        "b1": sh1[None, :].astype(jnp.float32),
        "w2": (raw["w2"] * s2[None, :]).astype(jnp.bfloat16),
        "b2": sh2[None, :].astype(jnp.float32),
        "w3": raw["w3"].astype(jnp.float32),
        "b3": raw["b3"][None, :].astype(jnp.float32),
    }


def _reference(feats, raw, wlh=None):
    """Pure-JAX f32 reference matching the PyTorch module (eval-mode BN)."""
    x = feats if wlh is None else feats + wlh
    x = x.astype(jnp.float32)

    def bn(h, g, b, m, v):
        return (h - m) / jnp.sqrt(v + BN_EPS) * g + b

    h1 = jnp.maximum(bn(x @ raw["w1"], raw["g1"], raw["be1"], raw["m1"], raw["v1"]), 0.0)
    h2 = jnp.maximum(bn(h1 @ raw["w2"], raw["g2"], raw["be2"], raw["m2"], raw["v2"]), 0.0)
    out = h2 @ raw["w3"] + raw["b3"][None, :]
    return {"coors": out[:, :4], "sigma": out[:, 4:]}


if __name__ == "__main__":
    key = jax.random.PRNGKey(0)
    kp, kx, kw, kx2, kx3, kw3 = jax.random.split(key, 6)

    raw = init_raw_params(kp)
    params = prepare_params(raw)

    # Case 1: with wlh, small N (single block, grid=1).
    N1 = 8
    feats1 = jax.random.normal(kx, (N1, D_IN), jnp.float32)
    wlh1 = jax.random.normal(kw, (N1, D_IN), jnp.float32)
    out1 = simple_head_forward(feats1, params, wlh=wlh1)
    jax.block_until_ready(out1)
    ref1 = _reference(feats1, raw, wlh=wlh1)
    assert out1["coors"].shape == (N1, 4) and out1["sigma"].shape == (N1, 4)
    assert jnp.allclose(out1["coors"], ref1["coors"], atol=3e-2, rtol=3e-2)
    assert jnp.allclose(out1["sigma"], ref1["sigma"], atol=3e-2, rtol=3e-2)

    # Case 2: wlh=None (specialized kernel), ragged N not a multiple of 8.
    N2 = 5
    feats2 = jax.random.normal(kx2, (N2, D_IN), jnp.float32)
    out2 = simple_head_forward(feats2, params, wlh=None)
    jax.block_until_ready(out2)
    ref2 = _reference(feats2, raw, wlh=None)
    assert out2["coors"].shape == (N2, 4) and out2["sigma"].shape == (N2, 4)
    assert jnp.allclose(out2["coors"], ref2["coors"], atol=3e-2, rtol=3e-2)
    assert jnp.allclose(out2["sigma"], ref2["sigma"], atol=3e-2, rtol=3e-2)

    # Case 3: large ragged N with wlh -> multi-step grid with a partial last
    # block and no padding copy; also exercises bf16 input acceptance.
    N3 = 2500
    feats3 = jax.random.normal(kx3, (N3, D_IN), jnp.float32)
    wlh3 = jax.random.normal(kw3, (N3, D_IN), jnp.float32)
    out3 = simple_head_forward(feats3, params, wlh=wlh3)
    jax.block_until_ready(out3)
    ref3 = _reference(feats3, raw, wlh=wlh3)
    assert out3["coors"].shape == (N3, 4) and out3["sigma"].shape == (N3, 4)
    assert jnp.allclose(out3["coors"], ref3["coors"], atol=5e-2, rtol=5e-2)
    assert jnp.allclose(out3["sigma"], ref3["sigma"], atol=5e-2, rtol=5e-2)

    out3b = simple_head_forward(feats3.astype(jnp.bfloat16), params,
                                wlh=wlh3.astype(jnp.bfloat16))
    jax.block_until_ready(out3b)
    assert jnp.allclose(out3b["coors"], ref3["coors"], atol=1e-1, rtol=1e-1)
    assert jnp.all(jnp.isfinite(out3b["sigma"]))

    print("KERNEL_OK")
</pallas_src>

<mosaic_0001>
module attributes {stable_mosaic.version = 11 : i64} {
  func.func @_head_kernel_wlh(%arg0: i32, %arg1: memref<8x512xf32, #tpu.memory_space<vmem>>, %arg2: memref<8x512xf32, #tpu.memory_space<vmem>>, %arg3: memref<512x256xbf16, #tpu.memory_space<vmem>>, %arg4: memref<1x256xf32, #tpu.memory_space<vmem>>, %arg5: memref<256x128xbf16, #tpu.memory_space<vmem>>, %arg6: memref<1x128xf32, #tpu.memory_space<vmem>>, %arg7: memref<128x8xf32, #tpu.memory_space<vmem>>, %arg8: memref<1x8xf32, #tpu.memory_space<vmem>>, %arg9: memref<8x8xf32, #tpu.memory_space<vmem>>) attributes {dimension_semantics = [#tpu.dimension_semantics<parallel>], iteration_bounds = array<i64: 1>, scalar_prefetch = 0 : i64, scratch_operands = 0 : i64, tpu.core_type = #tpu.core_type<tc>, window_params = [{transform_indices = @transform_0, window_bounds = array<i64: 8, 512>}, {transform_indices = @transform_1, window_bounds = array<i64: 8, 512>}, {pipeline_mode = #tpu.pipeline_mode<synchronous>, transform_indices = @transform_2, window_bounds = array<i64: 512, 256>}, {pipeline_mode = #tpu.pipeline_mode<synchronous>, transform_indices = @transform_3, window_bounds = array<i64: 1, 256>}, {pipeline_mode = #tpu.pipeline_mode<synchronous>, transform_indices = @transform_4, window_bounds = array<i64: 256, 128>}, {pipeline_mode = #tpu.pipeline_mode<synchronous>, transform_indices = @transform_5, window_bounds = array<i64: 1, 128>}, {pipeline_mode = #tpu.pipeline_mode<synchronous>, transform_indices = @transform_6, window_bounds = array<i64: 128, 8>}, {pipeline_mode = #tpu.pipeline_mode<synchronous>, transform_indices = @transform_7, window_bounds = array<i64: 1, 8>}, {transform_indices = @transform_8, window_bounds = array<i64: 8, 8>}]} {
    %c0 = arith.constant 0 : index
    %c0_0 = arith.constant 0 : index
    %0 = vector.load %arg1[%c0, %c0_0] : memref<8x512xf32, #tpu.memory_space<vmem>>, vector<8x512xf32>
    %c0_1 = arith.constant 0 : index
    %c0_2 = arith.constant 0 : index
    %1 = vector.load %arg2[%c0_1, %c0_2] : memref<8x512xf32, #tpu.memory_space<vmem>>, vector<8x512xf32>
    %2 = arith.addf %0, %1 : vector<8x512xf32>
    %3 = arith.truncf %2 : vector<8x512xf32> to vector<8x512xbf16>
    %c0_3 = arith.constant 0 : index
    %c0_4 = arith.constant 0 : index
    %4 = vector.load %arg3[%c0_3, %c0_4] : memref<512x256xbf16, #tpu.memory_space<vmem>>, vector<512x256xbf16>
    %cst = arith.constant dense<0.000000e+00> : vector<8x256xf32>
    %5 = tpu.matmul %3, %4, %cst {dimension_numbers = #tpu.dot_dimension_numbers<[1], [0], [0], [1], [0, 0, 1, 1], [], []>} : vector<8x512xbf16>, vector<512x256xbf16>, vector<8x256xf32> -> vector<8x256xf32>
    %c0_5 = arith.constant 0 : index
    %c0_6 = arith.constant 0 : index
    %6 = vector.load %arg4[%c0_5, %c0_6] : memref<1x256xf32, #tpu.memory_space<vmem>>, vector<1x256xf32>
    %7 = vector.broadcast %6 : vector<1x256xf32> to vector<8x256xf32>
    %8 = arith.addf %5, %7 : vector<8x256xf32>
    %cst_7 = arith.constant 0.000000e+00 : f32
    %9 = vector.broadcast %cst_7 : f32 to vector<8x256xf32>
    %10 = arith.maximumf %8, %9 : vector<8x256xf32>
    %11 = arith.truncf %10 : vector<8x256xf32> to vector<8x256xbf16>
    %c0_8 = arith.constant 0 : index
    %c0_9 = arith.constant 0 : index
    %12 = vector.load %arg5[%c0_8, %c0_9] : memref<256x128xbf16, #tpu.memory_space<vmem>>, vector<256x128xbf16>
    %cst_10 = arith.constant dense<0.000000e+00> : vector<8x128xf32>
    %13 = tpu.matmul %11, %12, %cst_10 {dimension_numbers = #tpu.dot_dimension_numbers<[1], [0], [0], [1], [0, 0, 1, 1], [], []>} : vector<8x256xbf16>, vector<256x128xbf16>, vector<8x128xf32> -> vector<8x128xf32>
    %c0_11 = arith.constant 0 : index
    %c0_12 = arith.constant 0 : index
    %14 = vector.load %arg6[%c0_11, %c0_12] : memref<1x128xf32, #tpu.memory_space<vmem>>, vector<1x128xf32>
    %15 = vector.broadcast %14 : vector<1x128xf32> to vector<8x128xf32>
    %16 = arith.addf %13, %15 : vector<8x128xf32>
    %cst_13 = arith.constant 0.000000e+00 : f32
    %17 = vector.broadcast %cst_13 : f32 to vector<8x128xf32>
    %18 = arith.maximumf %16, %17 : vector<8x128xf32>
    %c0_14 = arith.constant 0 : index
    %c0_15 = arith.constant 0 : index
    %19 = vector.load %arg7[%c0_14, %c0_15] : memref<128x8xf32, #tpu.memory_space<vmem>>, vector<128x8xf32>
    %cst_16 = arith.constant dense<0.000000e+00> : vector<8x8xf32>
    %20 = tpu.matmul %18, %19, %cst_16 {dimension_numbers = #tpu.dot_dimension_numbers<[1], [0], [0], [1], [0, 0, 1, 1], [], []>} : vector<8x128xf32>, vector<128x8xf32>, vector<8x8xf32> -> vector<8x8xf32>
    %c0_17 = arith.constant 0 : index
    %c0_18 = arith.constant 0 : index
    %21 = vector.load %arg8[%c0_17, %c0_18] : memref<1x8xf32, #tpu.memory_space<vmem>>, vector<1x8xf32>
    %22 = vector.broadcast %21 : vector<1x8xf32> to vector<8x8xf32>
    %23 = arith.addf %20, %22 : vector<8x8xf32>
    %c0_19 = arith.constant 0 : index
    %c0_20 = arith.constant 0 : index
    %24 = vector.load %arg9[%c0_19, %c0_20] : memref<8x8xf32, #tpu.memory_space<vmem>>, vector<8x8xf32>
    tpu.vector_store %arg9[%c0_19, %c0_20], %23 {strides = array<i32>} : memref<8x8xf32, #tpu.memory_space<vmem>>, vector<8x8xf32>,
    return
  }
  func.func @transform_0(%arg0: i32) -> (i32, i32) {
    %c0_i32 = arith.constant 0 : i32
    %c0_i32_0 = arith.constant 0 : i32
    return %arg0, %c0_i32 : i32, i32
  }
  func.func @transform_1(%arg0: i32) -> (i32, i32) {
    %c0_i32 = arith.constant 0 : i32
    %c0_i32_0 = arith.constant 0 : i32
    return %arg0, %c0_i32 : i32, i32
  }
  func.func @transform_2(%arg0: i32) -> (i32, i32) {
    %c0_i32 = arith.constant 0 : i32
    %c0_i32_0 = arith.constant 0 : i32
    %c0_i32_1 = arith.constant 0 : i32
    return %c0_i32, %c0_i32_0 : i32, i32
  }
  func.func @transform_3(%arg0: i32) -> (i32, i32) {
    %c0_i32 = arith.constant 0 : i32
    %c0_i32_0 = arith.constant 0 : i32
    %c0_i32_1 = arith.constant 0 : i32
    return %c0_i32, %c0_i32_0 : i32, i32
  }
  func.func @transform_4(%arg0: i32) -> (i32, i32) {
    %c0_i32 = arith.constant 0 : i32
    %c0_i32_0 = arith.constant 0 : i32
    %c0_i32_1 = arith.constant 0 : i32
    return %c0_i32, %c0_i32_0 : i32, i32
  }
  func.func @transform_5(%arg0: i32) -> (i32, i32) {
    %c0_i32 = arith.constant 0 : i32
    %c0_i32_0 = arith.constant 0 : i32
    %c0_i32_1 = arith.constant 0 : i32
    return %c0_i32, %c0_i32_0 : i32, i32
  }
  func.func @transform_6(%arg0: i32) -> (i32, i32) {
    %c0_i32 = arith.constant 0 : i32
    %c0_i32_0 = arith.constant 0 : i32
    %c0_i32_1 = arith.constant 0 : i32
    return %c0_i32, %c0_i32_0 : i32, i32
  }
  func.func @transform_7(%arg0: i32) -> (i32, i32) {
    %c0_i32 = arith.constant 0 : i32
    %c0_i32_0 = arith.constant 0 : i32
    %c0_i32_1 = arith.constant 0 : i32
    return %c0_i32, %c0_i32_0 : i32, i32
  }
  func.func @transform_8(%arg0: i32) -> (i32, i32) {
    %c0_i32 = arith.constant 0 : i32
    %c0_i32_0 = arith.constant 0 : i32
    return %arg0, %c0_i32 : i32, i32
  }
}

</mosaic_0001>

<llo_original>
// kernel: tpu_custom_call.1
$region0: #{tpu_custom_call.1}
  #allocation0 [shape = 'u32[]', space=smem, size = 0x4, offset = 0x4, fixed_abs, tag = 'smem constant byte address 0x4 - core index']
  #allocation1 [shape = 'u32[72,128]{1,0:T(1,128)}', space=vmem, size = 0x9000, scoped, tag = 'internal scratch']
  %s0 = inlined_call_operand.hbm [shape: f32[8,512], index: 0, kind: input, shape index: {}]
  %s1 = inlined_call_operand.hbm [shape: f32[8,512], index: 1, kind: input, shape index: {}]
  %s2 = inlined_call_operand.hbm [shape: bf16[512,256], index: 2, kind: input, shape index: {}]
  %s3 = inlined_call_operand.vmem [shape: f32[1,256], index: 3, kind: input, shape index: {}]
  %s4 = inlined_call_operand.vmem [shape: bf16[256,128], index: 4, kind: input, shape index: {}]
  %s5 = inlined_call_operand.vmem [shape: f32[1,128], index: 5, kind: input, shape index: {}]
  %s6 = inlined_call_operand.vmem [shape: f32[128,8], index: 6, kind: input, shape index: {}]
  %s7 = inlined_call_operand.vmem [shape: f32[1,8], index: 7, kind: input, shape index: {}]
  %s8 = inlined_call_operand.hbm [shape: f32[8,8], index: 8, kind: output, shape index: {}]
  %s9 = sld [smem:[#allocation0]]
  $region54: #{tpu_custom_call.1} parent=0
    _
  %s11 = ssub.s32 1, %s9
  %s12 = scalar_select 0, %s11, %s9
  $region1: #{tpu_custom_call.1} parent=0
    #allocation2 [shape = 'u8[16384]{0}', space=vmem, size = 0x4000, scoped, tag = 'input window, operand 0, single buffered']
    #allocation3 [shape = 's32[1]{0}', space=sflag, size = 0x4, scoped, tag = 'scoped memory for tpu_custom_call.1']
    #allocation4 [shape = 's32[1]{0}', space=sflag, size = 0x4, scoped, tag = 'scoped memory for tpu_custom_call.1']
    #allocation5 [shape = 'u8[16384]{0}', space=vmem, size = 0x4000, scoped, tag = 'input window, operand 1, single buffered']
    #allocation6 [shape = 's32[1]{0}', space=sflag, size = 0x4, scoped, tag = 'scoped memory for tpu_custom_call.1']
    #allocation7 [shape = 'u8[262144]{0}', space=vmem, size = 0x40000, scoped, tag = 'input window, operand 2, single buffered']
    #allocation8 [shape = 'u8[4096]{0}', space=vmem, size = 0x1000, scoped, tag = 'output window, operand 0, single buffered']
    %13 = vsyncpa [#allocation3], 0
    %14 = vsyncpa [#allocation6], 0
    %15 = vsyncpa [#allocation4], 0
    // Predicated region
    $region2: #{tpu_custom_call.1} parent=1 // pred_check
      _
    $region3: #{tpu_custom_call.1} parent=1 // pred_check_branch
      %17 = sbr.rel (0) target = $region5
    $region4: #{tpu_custom_call.1} parent=1 // pred_region
      %19 = vsyncadd [#allocation3], 0
      %s21 = sshll.u32 %s0, 4
      %s22 = int_to_ptr.hbm [resolvable:$true] %s21
      %s23 = sshll.u32 [#allocation2], 4
      %s24 = int_to_ptr.vmem [resolvable:$true] %s23
      %26 = dma.hbm_to_vmem [thread:$0]  %s22, 512, %s24, [#allocation3]
    $region5: #{tpu_custom_call.1} parent=1 // pred_fallthru
      _
    // Predicated region
    $region6: #{tpu_custom_call.1} parent=1 // pred_check
      _
    $region7: #{tpu_custom_call.1} parent=1 // pred_check_branch
      %28 = sbr.rel (0) target = $region9
    $region8: #{tpu_custom_call.1} parent=1 // pred_region
      %30 = vsyncadd [#allocation6], 0
      %s32 = sshll.u32 %s1, 4
      %s33 = int_to_ptr.hbm [resolvable:$true] %s32
      %s34 = sshll.u32 [#allocation5], 4
      %s35 = int_to_ptr.vmem [resolvable:$true] %s34
      %37 = dma.hbm_to_vmem [thread:$0]  %s33, 512, %s35, [#allocation6]
    $region9: #{tpu_custom_call.1} parent=1 // pred_fallthru
      _
    // Predicated region
    $region10: #{tpu_custom_call.1} parent=1 // pred_check
      _
    $region11: #{tpu_custom_call.1} parent=1 // pred_check_branch
      %39 = sbr.rel (0) target = $region13
    $region12: #{tpu_custom_call.1} parent=1 // pred_region
      %41 = vsyncadd [#allocation6], 0
      %s42 = sshll.u32 %s2, 4
      %s43 = int_to_ptr.hbm [resolvable:$true] %s42
      %s44 = sshll.u32 [#allocation7], 4
      %s45 = int_to_ptr.vmem [resolvable:$true] %s44
      %50 = dma.hbm_to_vmem [thread:$0]  %s43, 8192, %s45, [#allocation6], 128, 128, 8
    $region13: #{tpu_custom_call.1} parent=1 // pred_fallthru
      _
    // Predicated region
    $region14: #{tpu_custom_call.1} parent=1 // pred_check
      _
    $region15: #{tpu_custom_call.1} parent=1 // pred_check_branch
      %52 = sbr.rel (0) target = $region17
    $region16: #{tpu_custom_call.1} parent=1 // pred_region
      _
    $region17: #{tpu_custom_call.1} parent=1 // pred_fallthru
      _
    // Predicated region
    $region18: #{tpu_custom_call.1} parent=1 // pred_check
      _
    $region19: #{tpu_custom_call.1} parent=1 // pred_check_branch
      %54 = sbr.rel (0) target = $region21
    $region20: #{tpu_custom_call.1} parent=1 // pred_region
      _
    $region21: #{tpu_custom_call.1} parent=1 // pred_fallthru
      _
    // Predicated region
    $region22: #{tpu_custom_call.1} parent=1 // pred_check
      _
    $region23: #{tpu_custom_call.1} parent=1 // pred_check_branch
      %56 = sbr.rel (0) target = $region25
    $region24: #{tpu_custom_call.1} parent=1 // pred_region
      _
    $region25: #{tpu_custom_call.1} parent=1 // pred_fallthru
      _
    // Predicated region
    $region26: #{tpu_custom_call.1} parent=1 // pred_check
      _
    $region27: #{tpu_custom_call.1} parent=1 // pred_check_branch
      %58 = sbr.rel (0) target = $region29
    $region28: #{tpu_custom_call.1} parent=1 // pred_region
      _
    $region29: #{tpu_custom_call.1} parent=1 // pred_fallthru
      _
    // Predicated region
    $region30: #{tpu_custom_call.1} parent=1 // pred_check
      _
    $region31: #{tpu_custom_call.1} parent=1 // pred_check_branch
      %60 = sbr.rel (0) target = $region33
    $region32: #{tpu_custom_call.1} parent=1 // pred_region
      _
    $region33: #{tpu_custom_call.1} parent=1 // pred_fallthru
      _
    // Predicated region
    $region34: #{tpu_custom_call.1} parent=1 // pred_check
      _
    $region35: #{tpu_custom_call.1} parent=1 // pred_check_branch
      %62 = sbr.rel (0) target = $region37
    $region36: #{tpu_custom_call.1} parent=1 // pred_region
      %64 = dma.done [#allocation3], 512
    $region37: #{tpu_custom_call.1} parent=1 // pred_fallthru
      _
    // Predicated region
    $region38: #{tpu_custom_call.1} parent=1 // pred_check
      _
    $region39: #{tpu_custom_call.1} parent=1 // pred_check_branch
      %66 = sbr.rel (0) target = $region41
    $region40: #{tpu_custom_call.1} parent=1 // pred_region
      %68 = dma.done [#allocation6], 512
    $region41: #{tpu_custom_call.1} parent=1 // pred_fallthru
      _
    // Predicated region
    $region42: #{tpu_custom_call.1} parent=1 // pred_check
      _
    $region43: #{tpu_custom_call.1} parent=1 // pred_check_branch
      %70 = sbr.rel (0) target = $region45
    $region44: #{tpu_custom_call.1} parent=1 // pred_region
      %72 = dma.done [#allocation6], 8192
    $region45: #{tpu_custom_call.1} parent=1 // pred_fallthru
      _
    %v73 = vld [vmem:[#allocation2] sm:$0xff]
    %v74 = vld [vmem:[#allocation2 + $0x8] sm:$0xff]
    %v75 = vld [vmem:[#allocation2 + $0x10] sm:$0xff]
    %v76 = vld [vmem:[#allocation2 + $0x18] sm:$0xff]
    %v77 = vld [vmem:[#allocation5] sm:$0xff]
    %v78 = vld [vmem:[#allocation5 + $0x8] sm:$0xff]
    %v79 = vld [vmem:[#allocation5 + $0x10] sm:$0xff]
    %v80 = vld [vmem:[#allocation5 + $0x18] sm:$0xff]
    %v81 = vadd.f32 %v73, %v77
    %v82 = vadd.f32 %v74, %v78
    %v83 = vadd.f32 %v75, %v79
    %v84 = vadd.f32 %v76, %v80
    %v85 = vpack.c.bf16 %v81, %v81
    %v86 = vpack.c.bf16 %v82, %v82
    %v87 = vpack.c.bf16 %v83, %v83
    %v88 = vpack.c.bf16 %v84, %v84
    %v89 = vld [vmem:[#allocation7] sm:$0xff]
    %v90 = vld [vmem:[#allocation7 + $0x8] sm:$0xff]
    %v91 = vld [vmem:[#allocation7 + $0x10] sm:$0xff]
    %v92 = vld [vmem:[#allocation7 + $0x18] sm:$0xff]
    %v93 = vld [vmem:[#allocation7 + $0x20] sm:$0xff]
    %v94 = vld [vmem:[#allocation7 + $0x28] sm:$0xff]
    %v95 = vld [vmem:[#allocation7 + $0x30] sm:$0xff]
    %v96 = vld [vmem:[#allocation7 + $0x38] sm:$0xff]
    %v97 = vld [vmem:[#allocation7 + $0x40] sm:$0xff]
    %v98 = vld [vmem:[#allocation7 + $0x48] sm:$0xff]
    %v99 = vld [vmem:[#allocation7 + $0x50] sm:$0xff]
    %v100 = vld [vmem:[#allocation7 + $0x58] sm:$0xff]
    %v101 = vld [vmem:[#allocation7 + $0x60] sm:$0xff]
    %v102 = vld [vmem:[#allocation7 + $0x68] sm:$0xff]
    %v103 = vld [vmem:[#allocation7 + $0x70] sm:$0xff]
    %v104 = vld [vmem:[#allocation7 + $0x78] sm:$0xff]
    %v105 = vld [vmem:[#allocation7 + $0x80] sm:$0xff]
    %v106 = vld [vmem:[#allocation7 + $0x88] sm:$0xff]
    %v107 = vld [vmem:[#allocation7 + $0x90] sm:$0xff]
    %v108 = vld [vmem:[#allocation7 + $0x98] sm:$0xff]
    %v109 = vld [vmem:[#allocation7 + $0xa0] sm:$0xff]
    %v110 = vld [vmem:[#allocation7 + $0xa8] sm:$0xff]
    %v111 = vld [vmem:[#allocation7 + $0xb0] sm:$0xff]
    %v112 = vld [vmem:[#allocation7 + $0xb8] sm:$0xff]
    %v113 = vld [vmem:[#allocation7 + $0xc0] sm:$0xff]
    %v114 = vld [vmem:[#allocation7 + $0xc8] sm:$0xff]
    %v115 = vld [vmem:[#allocation7 + $0xd0] sm:$0xff]
    %v116 = vld [vmem:[#allocation7 + $0xd8] sm:$0xff]
    %v117 = vld [vmem:[#allocation7 + $0xe0] sm:$0xff]
    %v118 = vld [vmem:[#allocation7 + $0xe8] sm:$0xff]
    %v119 = vld [vmem:[#allocation7 + $0xf0] sm:$0xff]
    %v120 = vld [vmem:[#allocation7 + $0xf8] sm:$0xff]
    %v121 = vld [vmem:[#allocation7 + $0x100] sm:$0xff]
    %v122 = vld [vmem:[#allocation7 + $0x108] sm:$0xff]
    %v123 = vld [vmem:[#allocation7 + $0x110] sm:$0xff]
    %v124 = vld [vmem:[#allocation7 + $0x118] sm:$0xff]
    %v125 = vld [vmem:[#allocation7 + $0x120] sm:$0xff]
    %v126 = vld [vmem:[#allocation7 + $0x128] sm:$0xff]
    %v127 = vld [vmem:[#allocation7 + $0x130] sm:$0xff]
    %v128 = vld [vmem:[#allocation7 + $0x138] sm:$0xff]
    %v129 = vld [vmem:[#allocation7 + $0x140] sm:$0xff]
    %v130 = vld [vmem:[#allocation7 + $0x148] sm:$0xff]
    %v131 = vld [vmem:[#allocation7 + $0x150] sm:$0xff]
    %v132 = vld [vmem:[#allocation7 + $0x158] sm:$0xff]
    %v133 = vld [vmem:[#allocation7 + $0x160] sm:$0xff]
    %v134 = vld [vmem:[#allocation7 + $0x168] sm:$0xff]
    %v135 = vld [vmem:[#allocation7 + $0x170] sm:$0xff]
    %v136 = vld [vmem:[#allocation7 + $0x178] sm:$0xff]
    %v137 = vld [vmem:[#allocation7 + $0x180] sm:$0xff]
    %v138 = vld [vmem:[#allocation7 + $0x188] sm:$0xff]
    %v139 = vld [vmem:[#allocation7 + $0x190] sm:$0xff]
    %v140 = vld [vmem:[#allocation7 + $0x198] sm:$0xff]
    %v141 = vld [vmem:[#allocation7 + $0x1a0] sm:$0xff]
    %v142 = vld [vmem:[#allocation7 + $0x1a8] sm:$0xff]
    %v143 = vld [vmem:[#allocation7 + $0x1b0] sm:$0xff]
    %v144 = vld [vmem:[#allocation7 + $0x1b8] sm:$0xff]
    %v145 = vld [vmem:[#allocation7 + $0x1c0] sm:$0xff]
    %v146 = vld [vmem:[#allocation7 + $0x1c8] sm:$0xff]
    %v147 = vld [vmem:[#allocation7 + $0x1d0] sm:$0xff]
    %v148 = vld [vmem:[#allocation7 + $0x1d8] sm:$0xff]
    %v149 = vld [vmem:[#allocation7 + $0x1e0] sm:$0xff]
    %v150 = vld [vmem:[#allocation7 + $0x1e8] sm:$0xff]
    %v151 = vld [vmem:[#allocation7 + $0x1f0] sm:$0xff]
    %v152 = vld [vmem:[#allocation7 + $0x1f8] sm:$0xff]
    %v153 = vld [vmem:[%s3] sm:$0x3]
    %v155 = vperm.slane %v153, 0
    %v156 = vperm.slane %v153, 1
    %v223 = vunpack.c.l.b16 %v89
    %v224 = vunpack.c.h.b16 %v89
    %v225 = vunpack.c.l.b16 %v90
    %v226 = vunpack.c.h.b16 %v90
    %v227 = vunpack.c.l.b16 %v91
    %v228 = vunpack.c.h.b16 %v91
    %v229 = vunpack.c.l.b16 %v92
    %v230 = vunpack.c.h.b16 %v92
    %v231 = vunpack.c.l.b16 %v93
    %v232 = vunpack.c.h.b16 %v93
    %v233 = vunpack.c.l.b16 %v94
    %v234 = vunpack.c.h.b16 %v94
    %v235 = vunpack.c.l.b16 %v95
    %v236 = vunpack.c.h.b16 %v95
    %v237 = vunpack.c.l.b16 %v96
    %v238 = vunpack.c.h.b16 %v96
    %v239 = vunpack.c.l.b16 %v97
    %v240 = vunpack.c.h.b16 %v97
    %v241 = vunpack.c.l.b16 %v98
    %v242 = vunpack.c.h.b16 %v98
    %v243 = vunpack.c.l.b16 %v99
    %v244 = vunpack.c.h.b16 %v99
    %v245 = vunpack.c.l.b16 %v100
    %v246 = vunpack.c.h.b16 %v100
    %v247 = vunpack.c.l.b16 %v101
    %v248 = vunpack.c.h.b16 %v101
    %v249 = vunpack.c.l.b16 %v102
    %v250 = vunpack.c.h.b16 %v102
    %v251 = vunpack.c.l.b16 %v103
    %v252 = vunpack.c.h.b16 %v103
    %v253 = vunpack.c.l.b16 %v104
    %v254 = vunpack.c.h.b16 %v104
    %v255 = vunpack.c.l.b16 %v105
    %v256 = vunpack.c.h.b16 %v105
    %v257 = vunpack.c.l.b16 %v106
    %v258 = vunpack.c.h.b16 %v106
    %v259 = vunpack.c.l.b16 %v107
    %v260 = vunpack.c.h.b16 %v107
    %v261 = vunpack.c.l.b16 %v108
    %v262 = vunpack.c.h.b16 %v108
    %v263 = vunpack.c.l.b16 %v109
    %v264 = vunpack.c.h.b16 %v109
    %v265 = vunpack.c.l.b16 %v110
    %v266 = vunpack.c.h.b16 %v110
    %v267 = vunpack.c.l.b16 %v111
    %v268 = vunpack.c.h.b16 %v111
    %v269 = vunpack.c.l.b16 %v112
    %v270 = vunpack.c.h.b16 %v112
    %v271 = vunpack.c.l.b16 %v113
    %v272 = vunpack.c.h.b16 %v113
    %v273 = vunpack.c.l.b16 %v114
    %v274 = vunpack.c.h.b16 %v114
    %v275 = vunpack.c.l.b16 %v115
    %v276 = vunpack.c.h.b16 %v115
    %v277 = vunpack.c.l.b16 %v116
    %v278 = vunpack.c.h.b16 %v116
    %v279 = vunpack.c.l.b16 %v117
    %v280 = vunpack.c.h.b16 %v117
    %v281 = vunpack.c.l.b16 %v118
    %v282 = vunpack.c.h.b16 %v118
    %v283 = vunpack.c.l.b16 %v119
    %v284 = vunpack.c.h.b16 %v119
    %v285 = vunpack.c.l.b16 %v120
    %v286 = vunpack.c.h.b16 %v120
    %v287 = vunpack.c.l.b16 %v121
    %v288 = vunpack.c.h.b16 %v121
    %v289 = vunpack.c.l.b16 %v122
    %v290 = vunpack.c.h.b16 %v122
    %v291 = vunpack.c.l.b16 %v123
    %v292 = vunpack.c.h.b16 %v123
    %v293 = vunpack.c.l.b16 %v124
    %v294 = vunpack.c.h.b16 %v124
    %v295 = vunpack.c.l.b16 %v125
    %v296 = vunpack.c.h.b16 %v125
    %v297 = vunpack.c.l.b16 %v126
    %v298 = vunpack.c.h.b16 %v126
    %v299 = vunpack.c.l.b16 %v127
    %v300 = vunpack.c.h.b16 %v127
    %v301 = vunpack.c.l.b16 %v128
    %v302 = vunpack.c.h.b16 %v128
    %v303 = vunpack.c.l.b16 %v129
    %v304 = vunpack.c.h.b16 %v129
    %v305 = vunpack.c.l.b16 %v130
    %v306 = vunpack.c.h.b16 %v130
    %v307 = vunpack.c.l.b16 %v131
    %v308 = vunpack.c.h.b16 %v131
    %v309 = vunpack.c.l.b16 %v132
    %v310 = vunpack.c.h.b16 %v132
    %v311 = vunpack.c.l.b16 %v133
    %v312 = vunpack.c.h.b16 %v133
    %v313 = vunpack.c.l.b16 %v134
    %v314 = vunpack.c.h.b16 %v134
    %v315 = vunpack.c.l.b16 %v135
    %v316 = vunpack.c.h.b16 %v135
    %v317 = vunpack.c.l.b16 %v136
    %v318 = vunpack.c.h.b16 %v136
    %v319 = vunpack.c.l.b16 %v137
    %v320 = vunpack.c.h.b16 %v137
    %v321 = vunpack.c.l.b16 %v138
    %v322 = vunpack.c.h.b16 %v138
    %v323 = vunpack.c.l.b16 %v139
    %v324 = vunpack.c.h.b16 %v139
    %v325 = vunpack.c.l.b16 %v140
    %v326 = vunpack.c.h.b16 %v140
    %v327 = vunpack.c.l.b16 %v141
    %v328 = vunpack.c.h.b16 %v141
    %v329 = vunpack.c.l.b16 %v142
    %v330 = vunpack.c.h.b16 %v142
    %v331 = vunpack.c.l.b16 %v143
    %v332 = vunpack.c.h.b16 %v143
    %v333 = vunpack.c.l.b16 %v144
    %v334 = vunpack.c.h.b16 %v144
    %v335 = vunpack.c.l.b16 %v145
    %v336 = vunpack.c.h.b16 %v145
    %v337 = vunpack.c.l.b16 %v146
    %v338 = vunpack.c.h.b16 %v146
    %v339 = vunpack.c.l.b16 %v147
    %v340 = vunpack.c.h.b16 %v147
    %v341 = vunpack.c.l.b16 %v148
    %v342 = vunpack.c.h.b16 %v148
    %v343 = vunpack.c.l.b16 %v149
    %v344 = vunpack.c.h.b16 %v149
    %v345 = vunpack.c.l.b16 %v150
    %v346 = vunpack.c.h.b16 %v150
    %v347 = vunpack.c.l.b16 %v151
    %v348 = vunpack.c.h.b16 %v151
    %v349 = vunpack.c.l.b16 %v152
    %v350 = vunpack.c.h.b16 %v152
    %v351 = vpack.c.b16 %v225, %v223
    %v352 = vpack.c.b16 %v226, %v224
    %v353 = vpack.c.b16 %v229, %v227
    %v354 = vpack.c.b16 %v230, %v228
    %v355 = vpack.c.b16 %v233, %v231
    %v356 = vpack.c.b16 %v234, %v232
    %v357 = vpack.c.b16 %v237, %v235
    %v358 = vpack.c.b16 %v238, %v236
    %v359 = vpack.c.b16 %v241, %v239
    %v360 = vpack.c.b16 %v242, %v240
    %v361 = vpack.c.b16 %v245, %v243
    %v362 = vpack.c.b16 %v246, %v244
    %v363 = vpack.c.b16 %v249, %v247
    %v364 = vpack.c.b16 %v250, %v248
    %v365 = vpack.c.b16 %v253, %v251
    %v366 = vpack.c.b16 %v254, %v252
    %v367 = vpack.c.b16 %v257, %v255
    %v368 = vpack.c.b16 %v258, %v256
    %v369 = vpack.c.b16 %v261, %v259
    %v370 = vpack.c.b16 %v262, %v260
    %v371 = vpack.c.b16 %v265, %v263
    %v372 = vpack.c.b16 %v266, %v264
    %v373 = vpack.c.b16 %v269, %v267
    %v374 = vpack.c.b16 %v270, %v268
    %v375 = vpack.c.b16 %v273, %v271
    %v376 = vpack.c.b16 %v274, %v272
    %v377 = vpack.c.b16 %v277, %v275
    %v378 = vpack.c.b16 %v278, %v276
    %v379 = vpack.c.b16 %v281, %v279
    %v380 = vpack.c.b16 %v282, %v280
    %v381 = vpack.c.b16 %v285, %v283
    %v382 = vpack.c.b16 %v286, %v284
    %v383 = vpack.c.b16 %v289, %v287
    %v384 = vpack.c.b16 %v290, %v288
    %v385 = vpack.c.b16 %v293, %v291
    %v386 = vpack.c.b16 %v294, %v292
    %v387 = vpack.c.b16 %v297, %v295
    %v388 = vpack.c.b16 %v298, %v296
    %v389 = vpack.c.b16 %v301, %v299
    %v390 = vpack.c.b16 %v302, %v300
    %v391 = vpack.c.b16 %v305, %v303
    %v392 = vpack.c.b16 %v306, %v304
    %v393 = vpack.c.b16 %v309, %v307
    %v394 = vpack.c.b16 %v310, %v308
    %v395 = vpack.c.b16 %v313, %v311
    %v396 = vpack.c.b16 %v314, %v312
    %v397 = vpack.c.b16 %v317, %v315
    %v398 = vpack.c.b16 %v318, %v316
    %v399 = vpack.c.b16 %v321, %v319
    %v400 = vpack.c.b16 %v322, %v320
    %v401 = vpack.c.b16 %v325, %v323
    %v402 = vpack.c.b16 %v326, %v324
    %v403 = vpack.c.b16 %v329, %v327
    %v404 = vpack.c.b16 %v330, %v328
    %v405 = vpack.c.b16 %v333, %v331
    %v406 = vpack.c.b16 %v334, %v332
    %v407 = vpack.c.b16 %v337, %v335
    %v408 = vpack.c.b16 %v338, %v336
    %v409 = vpack.c.b16 %v341, %v339
    %v410 = vpack.c.b16 %v342, %v340
    %v411 = vpack.c.b16 %v345, %v343
    %v412 = vpack.c.b16 %v346, %v344
    %v413 = vpack.c.b16 %v349, %v347
    %v414 = vpack.c.b16 %v350, %v348
    %479 = vmatpush.bf16.msra.mxu0 %v365
    %480 = vmatpush.bf16.msra.mxu0 %v363
    %481 = vmatpush.bf16.msra.mxu0 %v361
    %482 = vmatpush.bf16.msra.mxu0 %v359
    %483 = vmatpush.bf16.msra.mxu0 %v357
    %484 = vmatpush.bf16.msra.mxu0 %v355
    %485 = vmatpush.bf16.msra.mxu0 %v353
    %486 = vmatpush.bf16.msra.mxu0 %v351
    %487 = vmatmul.bf16.gmra.mxu0 %v85
    %v488 = vpop.f32.mrf.mxu0
    %v489 = vadd.f32 %v155, %v488
    %v490 = vpop.f32.mrf.mxu0
    %491 = vdwg.mxu0
    %492 = vmatpush.bf16.msra.mxu0 %v381
    %493 = vmatpush.bf16.msra.mxu0 %v379
    %494 = vmatpush.bf16.msra.mxu0 %v377
    %495 = vmatpush.bf16.msra.mxu0 %v375
    %496 = vmatpush.bf16.msra.mxu0 %v373
    %497 = vmatpush.bf16.msra.mxu0 %v371
    %498 = vmatpush.bf16.msra.mxu0 %v369
    %499 = vmatpush.bf16.msra.mxu0 %v367
    %500 = vmatmul.bf16.gmra.mxu0 %v86
    %v501 = vpop.f32.mrf.mxu0
    %v502 = vadd.f32 %v489, %v501
    %v503 = vpop.f32.mrf.mxu0
    %504 = vdwg.mxu0
    %505 = vmatpush.bf16.msra.mxu0 %v397
    %506 = vmatpush.bf16.msra.mxu0 %v395
    %507 = vmatpush.bf16.msra.mxu0 %v393
    %508 = vmatpush.bf16.msra.mxu0 %v391
    %509 = vmatpush.bf16.msra.mxu0 %v389
    %510 = vmatpush.bf16.msra.mxu0 %v387
    %511 = vmatpush.bf16.msra.mxu0 %v385
    %512 = vmatpush.bf16.msra.mxu0 %v383
    %513 = vmatmul.bf16.gmra.mxu0 %v87
    %v514 = vpop.f32.mrf.mxu0
    %v515 = vadd.f32 %v502, %v514
    %v516 = vpop.f32.mrf.mxu0
    %517 = vdwg.mxu0
    %518 = vmatpush.bf16.msra.mxu0 %v413
    %519 = vmatpush.bf16.msra.mxu0 %v411
    %520 = vmatpush.bf16.msra.mxu0 %v409
    %521 = vmatpush.bf16.msra.mxu0 %v407
    %522 = vmatpush.bf16.msra.mxu0 %v405
    %523 = vmatpush.bf16.msra.mxu0 %v403
    %524 = vmatpush.bf16.msra.mxu0 %v401
    %525 = vmatpush.bf16.msra.mxu0 %v399
    %526 = vmatmul.bf16.gmra.mxu0 %v88
    %v527 = vpop.f32.mrf.mxu0
    %v528 = vadd.f32 %v515, %v527
    %v529 = vpop.f32.mrf.mxu0
    %530 = vdwg.mxu0
    %531 = vmatpush.bf16.msra.mxu0 %v366
    %532 = vmatpush.bf16.msra.mxu0 %v364
    %533 = vmatpush.bf16.msra.mxu0 %v362
    %534 = vmatpush.bf16.msra.mxu0 %v360
    %535 = vmatpush.bf16.msra.mxu0 %v358
    %536 = vmatpush.bf16.msra.mxu0 %v356
    %537 = vmatpush.bf16.msra.mxu0 %v354
    %538 = vmatpush.bf16.msra.mxu0 %v352
    %539 = vmatmul.bf16.gmra.mxu0 %v85
    %v540 = vpop.f32.mrf.mxu0
    %v541 = vadd.f32 %v156, %v540
    %v542 = vpop.f32.mrf.mxu0
    %543 = vdwg.mxu0
    %544 = vmatpush.bf16.msra.mxu0 %v382
    %545 = vmatpush.bf16.msra.mxu0 %v380
    %546 = vmatpush.bf16.msra.mxu0 %v378
    %547 = vmatpush.bf16.msra.mxu0 %v376
    %548 = vmatpush.bf16.msra.mxu0 %v374
    %549 = vmatpush.bf16.msra.mxu0 %v372
    %550 = vmatpush.bf16.msra.mxu0 %v370
    %551 = vmatpush.bf16.msra.mxu0 %v368
    %552 = vmatmul.bf16.gmra.mxu0 %v86
    %v553 = vpop.f32.mrf.mxu0
    %v554 = vadd.f32 %v541, %v553
    %v555 = vpop.f32.mrf.mxu0
    %556 = vdwg.mxu0
    %557 = vmatpush.bf16.msra.mxu0 %v398
    %558 = vmatpush.bf16.msra.mxu0 %v396
    %559 = vmatpush.bf16.msra.mxu0 %v394
    %560 = vmatpush.bf16.msra.mxu0 %v392
    %561 = vmatpush.bf16.msra.mxu0 %v390
    %562 = vmatpush.bf16.msra.mxu0 %v388
    %563 = vmatpush.bf16.msra.mxu0 %v386
    %564 = vmatpush.bf16.msra.mxu0 %v384
    %565 = vmatmul.bf16.gmra.mxu0 %v87
    %v566 = vpop.f32.mrf.mxu0
    %v567 = vadd.f32 %v554, %v566
    %v568 = vpop.f32.mrf.mxu0
    %569 = vdwg.mxu0
    %570 = vmatpush.bf16.msra.mxu0 %v414
    %571 = vmatpush.bf16.msra.mxu0 %v412
    %572 = vmatpush.bf16.msra.mxu0 %v410
    %573 = vmatpush.bf16.msra.mxu0 %v408
    %574 = vmatpush.bf16.msra.mxu0 %v406
    %575 = vmatpush.bf16.msra.mxu0 %v404
    %576 = vmatpush.bf16.msra.mxu0 %v402
    %577 = vmatpush.bf16.msra.mxu0 %v400
    %578 = vmatmul.bf16.gmra.mxu0 %v88
    %v579 = vpop.f32.mrf.mxu0
    %v580 = vadd.f32 %v567, %v579
    %v581 = vpop.f32.mrf.mxu0
    %582 = vdwg.mxu0
    %v583 = vmax.f32 %v528, 0.0
    %v584 = vmax.f32 %v580, 0.0
    %v585 = vpack.c.bf16 %v583, %v583
    %v586 = vpack.c.bf16 %v584, %v584
    %v587 = vld [vmem:[%s4] sm:$0xf]
    %v588 = vld [vmem:[%s4 + $0x4] sm:$0xf]
    %v589 = vld [vmem:[%s4 + $0x8] sm:$0xf]
    %v590 = vld [vmem:[%s4 + $0xc] sm:$0xf]
    %v591 = vld [vmem:[%s4 + $0x10] sm:$0xf]
    %v592 = vld [vmem:[%s4 + $0x14] sm:$0xf]
    %v593 = vld [vmem:[%s4 + $0x18] sm:$0xf]
    %v594 = vld [vmem:[%s4 + $0x1c] sm:$0xf]
    %v595 = vld [vmem:[%s4 + $0x20] sm:$0xf]
    %v596 = vld [vmem:[%s4 + $0x24] sm:$0xf]
    %v597 = vld [vmem:[%s4 + $0x28] sm:$0xf]
    %v598 = vld [vmem:[%s4 + $0x2c] sm:$0xf]
    %v599 = vld [vmem:[%s4 + $0x30] sm:$0xf]
    %v600 = vld [vmem:[%s4 + $0x34] sm:$0xf]
    %v601 = vld [vmem:[%s4 + $0x38] sm:$0xf]
    %v602 = vld [vmem:[%s4 + $0x3c] sm:$0xf]
    %v603 = vld [vmem:[%s4 + $0x40] sm:$0xf]
    %v604 = vld [vmem:[%s4 + $0x44] sm:$0xf]
    %v605 = vld [vmem:[%s4 + $0x48] sm:$0xf]
    %v606 = vld [vmem:[%s4 + $0x4c] sm:$0xf]
    %v607 = vld [vmem:[%s4 + $0x50] sm:$0xf]
    %v608 = vld [vmem:[%s4 + $0x54] sm:$0xf]
    %v609 = vld [vmem:[%s4 + $0x58] sm:$0xf]
    %v610 = vld [vmem:[%s4 + $0x5c] sm:$0xf]
    %v611 = vld [vmem:[%s4 + $0x60] sm:$0xf]
    %v612 = vld [vmem:[%s4 + $0x64] sm:$0xf]
    %v613 = vld [vmem:[%s4 + $0x68] sm:$0xf]
    %v614 = vld [vmem:[%s4 + $0x6c] sm:$0xf]
    %v615 = vld [vmem:[%s4 + $0x70] sm:$0xf]
    %v616 = vld [vmem:[%s4 + $0x74] sm:$0xf]
    %v617 = vld [vmem:[%s4 + $0x78] sm:$0xf]
    %v618 = vld [vmem:[%s4 + $0x7c] sm:$0xf]
    %v619 = vld [vmem:[%s5] sm:$0x1]
    %v621 = vperm.slane %v619, 0
    %v655 = vunpack.c.l.b16 %v587
    %v656 = vunpack.c.l.b16 %v588
    %v657 = vunpack.c.l.b16 %v589
    %v658 = vunpack.c.l.b16 %v590
    %v659 = vunpack.c.l.b16 %v591
    %v660 = vunpack.c.l.b16 %v592
    %v661 = vunpack.c.l.b16 %v593
    %v662 = vunpack.c.l.b16 %v594
    %v663 = vunpack.c.l.b16 %v595
    %v664 = vunpack.c.l.b16 %v596
    %v665 = vunpack.c.l.b16 %v597
    %v666 = vunpack.c.l.b16 %v598
    %v667 = vunpack.c.l.b16 %v599
    %v668 = vunpack.c.l.b16 %v600
    %v669 = vunpack.c.l.b16 %v601
    %v670 = vunpack.c.l.b16 %v602
    %v671 = vunpack.c.l.b16 %v603
    %v672 = vunpack.c.l.b16 %v604
    %v673 = vunpack.c.l.b16 %v605
    %v674 = vunpack.c.l.b16 %v606
    %v675 = vunpack.c.l.b16 %v607
    %v676 = vunpack.c.l.b16 %v608
    %v677 = vunpack.c.l.b16 %v609
    %v678 = vunpack.c.l.b16 %v610
    %v679 = vunpack.c.l.b16 %v611
    %v680 = vunpack.c.l.b16 %v612
    %v681 = vunpack.c.l.b16 %v613
    %v682 = vunpack.c.l.b16 %v614
    %v683 = vunpack.c.l.b16 %v615
    %v684 = vunpack.c.l.b16 %v616
    %v685 = vunpack.c.l.b16 %v617
    %v686 = vunpack.c.l.b16 %v618
    %v687 = vpack.c.b16 %v656, %v655
    %v688 = vpack.c.b16 %v658, %v657
    %v689 = vpack.c.b16 %v660, %v659
    %v690 = vpack.c.b16 %v662, %v661
    %v691 = vpack.c.b16 %v664, %v663
    %v692 = vpack.c.b16 %v666, %v665
    %v693 = vpack.c.b16 %v668, %v667
    %v694 = vpack.c.b16 %v670, %v669
    %v695 = vpack.c.b16 %v672, %v671
    %v696 = vpack.c.b16 %v674, %v673
    %v697 = vpack.c.b16 %v676, %v675
    %v698 = vpack.c.b16 %v678, %v677
    %v699 = vpack.c.b16 %v680, %v679
    %v700 = vpack.c.b16 %v682, %v681
    %v701 = vpack.c.b16 %v684, %v683
    %v702 = vpack.c.b16 %v686, %v685
    %719 = vmatpush.bf16.msra.mxu0 %v694
    %720 = vmatpush.bf16.msra.mxu0 %v693
    %721 = vmatpush.bf16.msra.mxu0 %v692
    %722 = vmatpush.bf16.msra.mxu0 %v691
    %723 = vmatpush.bf16.msra.mxu0 %v690
    %724 = vmatpush.bf16.msra.mxu0 %v689
    %725 = vmatpush.bf16.msra.mxu0 %v688
    %726 = vmatpush.bf16.msra.mxu0 %v687
    %727 = vmatmul.bf16.gmra.mxu0 %v585
    %v728 = vpop.f32.mrf.mxu0
    %v729 = vadd.f32 %v621, %v728
    %v730 = vpop.f32.mrf.mxu0
    %731 = vdwg.mxu0
    %732 = vmatpush.bf16.msra.mxu0 %v702
    %733 = vmatpush.bf16.msra.mxu0 %v701
    %734 = vmatpush.bf16.msra.mxu0 %v700
    %735 = vmatpush.bf16.msra.mxu0 %v699
    %736 = vmatpush.bf16.msra.mxu0 %v698
    %737 = vmatpush.bf16.msra.mxu0 %v697
    %738 = vmatpush.bf16.msra.mxu0 %v696
    %739 = vmatpush.bf16.msra.mxu0 %v695
    %740 = vmatmul.bf16.gmra.mxu0 %v586
    %v741 = vpop.f32.mrf.mxu0
    %v742 = vadd.f32 %v729, %v741
    %v743 = vpop.f32.mrf.mxu0
    %744 = vdwg.mxu0
    %v745 = vmax.f32 %v742, 0.0
    %v746 = vld [vmem:[%s6] sm:$0xff]
    %v747 = vld [vmem:[%s6 + $0x8] sm:$0xff]
    %v748 = vld [vmem:[%s6 + $0x10] sm:$0xff]
    %v749 = vld [vmem:[%s6 + $0x18] sm:$0xff]
    %v750 = vld [vmem:[%s6 + $0x20] sm:$0xff]
    %v751 = vld [vmem:[%s6 + $0x28] sm:$0xff]
    %v752 = vld [vmem:[%s6 + $0x30] sm:$0xff]
    %v753 = vld [vmem:[%s6 + $0x38] sm:$0xff]
    %v754 = vld [vmem:[%s6 + $0x40] sm:$0xff]
    %v755 = vld [vmem:[%s6 + $0x48] sm:$0xff]
    %v756 = vld [vmem:[%s6 + $0x50] sm:$0xff]
    %v757 = vld [vmem:[%s6 + $0x58] sm:$0xff]
    %v758 = vld [vmem:[%s6 + $0x60] sm:$0xff]
    %v759 = vld [vmem:[%s6 + $0x68] sm:$0xff]
    %v760 = vld [vmem:[%s6 + $0x70] sm:$0xff]
    %v761 = vld [vmem:[%s6 + $0x78] sm:$0xff]
    %v762 = vld [vmem:[%s7] sm:$0x1]
    %v764 = vperm.slane %v762, 0
    %766 = vmatpush.msra.mxu0 %v761
    %767 = vmatpush.msra.mxu0 %v760
    %768 = vmatpush.msra.mxu0 %v759
    %769 = vmatpush.msra.mxu0 %v758
    %770 = vmatpush.msra.mxu0 %v757
    %771 = vmatpush.msra.mxu0 %v756
    %772 = vmatpush.msra.mxu0 %v755
    %773 = vmatpush.msra.mxu0 %v754
    %774 = vmatpush.msra.mxu0 %v753
    %775 = vmatpush.msra.mxu0 %v752
    %776 = vmatpush.msra.mxu0 %v751
    %777 = vmatpush.msra.mxu0 %v750
    %778 = vmatpush.msra.mxu0 %v749
    %779 = vmatpush.msra.mxu0 %v748
    %780 = vmatpush.msra.mxu0 %v747
    %781 = vmatpush.msra.mxu0 %v746
    %782 = vmatmul.f32.gmra.mxu0 %v745
    %v783 = vpop.f32.mrf.mxu0
    %v784 = vadd.f32 %v764, %v783
    %785 = vdwg.mxu0
    %vm786 = vcmask 64512
    %787 = vst.msk [vmem:[#allocation8] sm:$0xff] %vm786, %v784
    // Predicated region
    $region46: #{tpu_custom_call.1} parent=1 // pred_check
      _
    $region47: #{tpu_custom_call.1} parent=1 // pred_check_branch
      %789 = sbr.rel (0) target = $region49
    $region48: #{tpu_custom_call.1} parent=1 // pred_region
      %791 = vsyncadd [#allocation4], 0
      %s793 = sshll.u32 [#allocation8], 4
      %s794 = int_to_ptr.vmem [resolvable:$true] %s793
      %s795 = sshll.u32 %s8, 4
      %s796 = int_to_ptr.hbm [resolvable:$true] %s795
      %798 = dma.vmem_to_hbm [thread:$0]  %s794, 128, %s796, [#allocation4]
    $region49: #{tpu_custom_call.1} parent=1 // pred_fallthru
      _
    // Predicated region
    $region50: #{tpu_custom_call.1} parent=1 // pred_check
      _
    $region51: #{tpu_custom_call.1} parent=1 // pred_check_branch
      %800 = sbr.rel (0) target = $region53
    $region52: #{tpu_custom_call.1} parent=1 // pred_region
      %802 = dma.done [#allocation4], 128
    $region53: #{tpu_custom_call.1} parent=1 // pred_fallthru
      _
    %803 = vsyncpa [#allocation3], 1
    %804 = vsyncpa [#allocation6], 1
    %805 = vsyncpa [#allocation4], 1

</llo_original>
